<compile_context>
chip_gen: v5e
topology: v5e:2x2
jax: 0.10.0
libtpu: 0.0.40
codegen_flags: <defaults>
</compile_context>

<pallas_src>
import functools

import jax
import jax.numpy as jnp
from jax.experimental import pallas as pl
from jax.experimental.pallas import tpu as pltpu


# ---------------------------------------------------------------------------
# Pallas kernel: multibox loss hot path (one batch element per grid row,
# hard-negative mining tiled over the inner "arbitrary" j axis).
# ---------------------------------------------------------------------------
def _multibox_loss_kernel(conf_t_ref, loc_p_ref, loc_t_ref,
                          landm_p_ref, landm_t_ref, conf_p_ref,
                          out_ref,
                          ce_s, mined_s, rank_s, part_s,
                          *, neg_pos_ratio, p_true, tj):
    P = mined_s.shape[1]                      # padded prior count (lane-dense)
    C = conf_p_ref.shape[0]
    jt = pl.program_id(1)
    last_j = pl.num_programs(1) - 1

    conf_t = conf_t_ref[...]                  # (1, P) int32
    pos = conf_t != 0                         # loc / cls positives
    lane = jax.lax.broadcasted_iota(jnp.int32, (1, P), 1)
    valid = lane < p_true                     # mask out padded priors

    # ---- once per batch element: everything that does not need mining ------
    @pl.when(jt == 0)
    def _():
        pos1 = conf_t > 0                     # landmark positives

        def smooth_l1(d):
            ad = jnp.abs(d)
            return jnp.where(ad < 1.0, 0.5 * d * d, ad - 0.5)

        # localization loss: (4, P) diff, pos (1,P) broadcasts over sublanes
        l_loc = smooth_l1(loc_p_ref[...] - loc_t_ref[...])
        loss_l_b = jnp.sum(jnp.where(pos, l_loc, 0.0))

        # landmark loss: (10, P)
        l_lm = smooth_l1(landm_p_ref[...] - landm_t_ref[...])
        loss_lm_b = jnp.sum(jnp.where(pos1, l_lm, 0.0))

        # per-prior CE = logsumexp(conf) - conf[target], target = 1 for pos
        conf_t1 = jnp.where(pos, jnp.int32(1), conf_t)
        if C == 2:
            # specialized: one exp per prior, direct 2-class select
            c0 = conf_p_ref[0:1, :]
            c1 = conf_p_ref[1:2, :]
            hi = jnp.maximum(c0, c1)
            lo = jnp.minimum(c0, c1)
            lse = hi + jnp.log(1.0 + jnp.exp(lo - hi))
            gathered = jnp.where(conf_t1 == 1, c1, c0)
        else:
            cls = [conf_p_ref[c:c + 1, :] for c in range(C)]
            x_max = cls[0]
            for c in range(1, C):
                x_max = jnp.maximum(x_max, cls[c])
            s = jnp.zeros_like(x_max)
            gathered = jnp.zeros_like(x_max)
            for c in range(C):
                s = s + jnp.exp(cls[c] - x_max)
                gathered = gathered + jnp.where(conf_t1 == c, cls[c], 0.0)
            lse = x_max + jnp.log(s)
        ce_all = lse - gathered                                   # (1, P)
        mined = jnp.where(pos, 0.0, ce_all)                       # loss_c[pos]=0
        mined = jnp.where(valid, mined, -1e30)                    # pads never neg

        ce_s[...] = ce_all
        mined_s[...] = mined
        rank_s[...] = jnp.zeros_like(rank_s)

        n_b = jnp.sum(pos.astype(jnp.float32))
        n1_b = jnp.sum(pos1.astype(jnp.float32))
        lane128 = jax.lax.broadcasted_iota(jnp.int32, (1, 128), 1)
        part_s[...] = jnp.where(lane128 == 0, loss_l_b,
                      jnp.where(lane128 == 2, loss_lm_b,
                      jnp.where(lane128 == 3, n_b,
                      jnp.where(lane128 == 4, n1_b, 0.0))))

    # ---- every j tile: accumulate stable descending rank via the MXU -------
    # rank_i = #{j : l_j > l_i  or (l_j == l_i and j < i)}  (stable tie-break,
    # matches PyTorch double-argsort). Tie-break iota uses the GLOBAL j offset.
    off = pl.multiple_of(jt * tj, tj)
    li = mined_s[...]                                             # (1, P) lane-major
    lj = mined_s[:, pl.ds(off, tj)].reshape(tj, 1)                # (tj, 1)
    jg = off + jax.lax.broadcasted_iota(jnp.int32, (tj, P), 0)
    ig = jax.lax.broadcasted_iota(jnp.int32, (tj, P), 1)
    before = (lj > li) | ((lj == li) & (jg < ig))                 # (tj, P)
    # MXU offload: bf16 inputs, f32 accumulation (exact for 0/1 counts).
    ones_j = jnp.ones((1, tj), jnp.bfloat16)
    rank_s[...] = rank_s[...] + jnp.dot(
        ones_j, before.astype(jnp.bfloat16),
        preferred_element_type=jnp.float32)

    # ---- after the last j tile: select negatives, sum CE, emit scalars -----
    @pl.when(jt == last_j)
    def _():
        num_pos = jnp.sum(pos.astype(jnp.float32))
        num_neg = jnp.minimum(neg_pos_ratio * num_pos,
                              jnp.float32(p_true - 1))
        neg = rank_s[...] < num_neg                               # (1, P) lane-major
        sel = pos | neg
        loss_c_b = jnp.sum(jnp.where(sel, ce_s[...], 0.0))
        lane128 = jax.lax.broadcasted_iota(jnp.int32, (1, 128), 1)
        out_ref[...] = jnp.where(lane128 == 1, loss_c_b, part_s[...])


# ---------------------------------------------------------------------------
# Plain-JAX glue: SSD / RetinaFace matching (jaccard + encode), vmapped
# ---------------------------------------------------------------------------
def _point_form(priors):
    return jnp.concatenate([priors[:, :2] - priors[:, 2:] / 2,
                            priors[:, :2] + priors[:, 2:] / 2], axis=1)


def _jaccard(box_a, box_b):
    max_xy = jnp.minimum(box_a[:, None, 2:], box_b[None, :, 2:])
    min_xy = jnp.maximum(box_a[:, None, :2], box_b[None, :, :2])
    wh = jnp.clip(max_xy - min_xy, 0.0)
    inter = wh[..., 0] * wh[..., 1]
    area_a = ((box_a[:, 2] - box_a[:, 0]) * (box_a[:, 3] - box_a[:, 1]))[:, None]
    area_b = ((box_b[:, 2] - box_b[:, 0]) * (box_b[:, 3] - box_b[:, 1]))[None, :]
    return inter / (area_a + area_b - inter)


def _encode(matched, priors, variances):
    # NOTE: jnp.log of degenerate matched boxes can be -inf (same hazard as the
    # PyTorch original); it only reaches the loss for positive priors.
    g_cxcy = (matched[:, :2] + matched[:, 2:]) / 2 - priors[:, :2]
    g_cxcy = g_cxcy / (variances[0] * priors[:, 2:])
    g_wh = (matched[:, 2:] - matched[:, :2]) / priors[:, 2:]
    g_wh = jnp.log(g_wh) / variances[1]
    return jnp.concatenate([g_cxcy, g_wh], axis=1)


def _encode_landm(matched, priors, variances):
    m = matched.reshape(-1, 5, 2)
    g = (m - priors[:, None, :2]) / (variances[0] * priors[:, None, 2:])
    return g.reshape(-1, 10)


def _match_single(threshold, truths, priors, variances, labels, landms):
    """Matching for ONE image (vectorized scatters); vmapped over the batch."""
    G = truths.shape[0]
    P = priors.shape[0]

    overlaps = _jaccard(truths, _point_form(priors))              # (G, P)
    best_prior_overlap = jnp.max(overlaps, axis=1)                # (G,)
    best_prior_idx = jnp.argmax(overlaps, axis=1)                 # (G,)
    valid_gt = best_prior_overlap >= 0.2
    any_valid = jnp.any(valid_gt)

    best_truth_overlap = jnp.max(overlaps, axis=0)                # (P,)
    best_truth_idx = jnp.argmax(overlaps, axis=0)                 # (P,)

    prior_ids = jnp.arange(P, dtype=jnp.int32)
    claims = best_prior_idx[:, None] == prior_ids[None, :]        # (G, P)

    forced = jnp.any(claims & valid_gt[:, None], axis=0)          # (P,)
    best_truth_overlap = jnp.where(forced, 2.0, best_truth_overlap)

    gt_ids = jnp.arange(G, dtype=jnp.int32)[:, None]              # (G, 1)
    claim_j = jnp.max(jnp.where(claims, gt_ids, -1), axis=0)      # (P,)
    best_truth_idx = jnp.where(claim_j >= 0, claim_j, best_truth_idx)

    matches = truths[best_truth_idx]                              # (P, 4)
    conf = labels[best_truth_idx]                                 # (P,)
    conf = jnp.where(best_truth_overlap < threshold, 0.0, conf).astype(jnp.int32)
    loc = _encode(matches, priors, variances)
    landm = _encode_landm(landms[best_truth_idx], priors, variances)

    loc = jnp.where(any_valid, loc, jnp.zeros_like(loc))
    conf = jnp.where(any_valid, conf, jnp.zeros_like(conf))
    landm = jnp.where(any_valid, landm, jnp.zeros_like(landm))
    return loc, conf, landm


# ---------------------------------------------------------------------------
# Wrapper = MultiBoxLoss.forward
# ---------------------------------------------------------------------------
@functools.partial(jax.jit,
                   static_argnames=("num_classes", "overlap_thresh", "neg_pos",
                                    "variances"))
def multibox_loss(loc_data, conf_data, landm_data, priors, targets, *,
                  num_classes=2, overlap_thresh=0.35, neg_pos=7,
                  variances=(0.1, 0.2)):
    B, P, C = conf_data.shape
    assert C == num_classes

    # ---- vectorized matching glue (vmap over the batch) ---------------------
    match_fn = lambda t: _match_single(overlap_thresh, t[:, :4], priors,
                                       variances, t[:, -1], t[:, 4:14])
    loc_t, conf_t, landm_t = jax.vmap(match_fn)(targets)
    loc_t = loc_t.astype(jnp.float32)                 # (B, P, 4)
    conf_t = conf_t.astype(jnp.int32)                 # (B, P)
    landm_t = landm_t.astype(jnp.float32)             # (B, P, 10)

    # ---- per-tensor lane-dense transposes (no concatenated slab) ------------
    loc_p_t = jnp.transpose(loc_data.astype(jnp.float32), (0, 2, 1))     # (B,4,P)
    loc_t_t = jnp.transpose(loc_t, (0, 2, 1))                            # (B,4,P)
    landm_p_t = jnp.transpose(landm_data.astype(jnp.float32), (0, 2, 1)) # (B,10,P)
    landm_t_t = jnp.transpose(landm_t, (0, 2, 1))                        # (B,10,P)
    conf_p_t = jnp.transpose(conf_data.astype(jnp.float32), (0, 2, 1))   # (B,C,P)
    conf_t3 = conf_t[:, None, :]                                         # (B,1,P)

    # ---- pad the prior axis to a multiple of 128 (unmasked lane-dense tiles)
    P_pad = ((P + 127) // 128) * 128
    if P_pad != P:
        pad = [(0, 0), (0, 0), (0, P_pad - P)]
        loc_p_t = jnp.pad(loc_p_t, pad)
        loc_t_t = jnp.pad(loc_t_t, pad)
        landm_p_t = jnp.pad(landm_p_t, pad)
        landm_t_t = jnp.pad(landm_t_t, pad)
        conf_p_t = jnp.pad(conf_p_t, pad)
        conf_t3 = jnp.pad(conf_t3, pad)   # padded priors -> background (never pos)

    # mining j-tile (multiple of 128); TODO(synk): per-chip tuning (v6e: 256).
    TJ = 256 if P_pad % 256 == 0 else 128
    n_jt = P_pad // TJ

    # explicit scoped-VMEM budget: double-buffered inputs + scratch + mining slab
    in_bytes = (4 + 4 + 10 + 10 + C + 1) * P_pad * 4
    scratch_bytes = 3 * P_pad * 4 + 128 * 4
    mine_bytes = 8 * TJ * P_pad
    vmem_limit = int(min(max(2 * in_bytes + scratch_bytes + mine_bytes + (8 << 20),
                             32 << 20), 64 << 20))

    kernel = functools.partial(_multibox_loss_kernel,
                               neg_pos_ratio=neg_pos, p_true=P, tj=TJ)
    out = pl.pallas_call(
        kernel,
        out_shape=jax.ShapeDtypeStruct((B, 1, 128), jnp.float32),
        grid_spec=pltpu.PrefetchScalarGridSpec(
            num_scalar_prefetch=0,
            grid=(B, n_jt),
            in_specs=[
                pl.BlockSpec((None, 1, P_pad), lambda b, j: (b, 0, 0)),
                pl.BlockSpec((None, 4, P_pad), lambda b, j: (b, 0, 0)),
                pl.BlockSpec((None, 4, P_pad), lambda b, j: (b, 0, 0)),
                pl.BlockSpec((None, 10, P_pad), lambda b, j: (b, 0, 0)),
                pl.BlockSpec((None, 10, P_pad), lambda b, j: (b, 0, 0)),
                pl.BlockSpec((None, C, P_pad), lambda b, j: (b, 0, 0)),
            ],
            out_specs=pl.BlockSpec((None, 1, 128), lambda b, j: (b, 0, 0)),
            scratch_shapes=[
                pltpu.VMEM((1, P_pad), jnp.float32),   # ce_all for current batch
                pltpu.VMEM((1, P_pad), jnp.float32),   # mined (pos zeroed, pads -inf)
                pltpu.VMEM((1, P_pad), jnp.float32),   # rank accumulator
                pltpu.VMEM((1, 128), jnp.float32),     # per-batch partial scalars
            ]),
        compiler_params=pltpu.CompilerParams(
            dimension_semantics=("parallel", "arbitrary"),
            vmem_limit_bytes=vmem_limit),
    )(conf_t3, loc_p_t, loc_t_t, landm_p_t, landm_t_t, conf_p_t)

    out = out[:, 0, :]                                 # (B, 128)
    loss_l = jnp.sum(out[:, 0])
    loss_c = jnp.sum(out[:, 1])
    loss_landm = jnp.sum(out[:, 2])
    n = jnp.maximum(jnp.sum(out[:, 3]), 1.0)
    n1 = jnp.maximum(jnp.sum(out[:, 4]), 1.0)
    return loss_l / n, loss_c / n, loss_landm / n1


if __name__ == "__main__":
    key = jax.random.PRNGKey(0)
    B, P, C, G = 2, 128, 2, 3   # batch, num_priors, num_classes, gt boxes / image

    # priors: 8x8 grid x 2 scales = 128 anchors, (cx, cy, w, h) in [0, 1]
    xs = (jnp.arange(8, dtype=jnp.float32) + 0.5) / 8.0
    cx, cy = jnp.meshgrid(xs, xs, indexing="xy")
    centers = jnp.stack([cx.ravel(), cy.ravel()], axis=1)             # (64, 2)
    priors = jnp.concatenate([
        jnp.concatenate([centers, jnp.full((64, 2), 0.2, jnp.float32)], axis=1),
        jnp.concatenate([centers, jnp.full((64, 2), 0.4, jnp.float32)], axis=1),
    ], axis=0)                                                         # (128, 4)

    k1, k2, k3, k4, k5, k6 = jax.random.split(key, 6)
    loc_data = jax.random.normal(k1, (B, P, 4), jnp.float32)
    conf_data = jax.random.normal(k2, (B, P, C), jnp.float32)
    landm_data = jax.random.normal(k3, (B, P, 10), jnp.float32)

    # ground-truth targets: (B, G, 15) = 4 bbox corners + 10 landmarks + label
    gt_c = jax.random.uniform(k4, (B, G, 2), minval=0.25, maxval=0.75)
    gt_wh = jax.random.uniform(k5, (B, G, 2), minval=0.25, maxval=0.45)
    boxes = jnp.concatenate([gt_c - gt_wh / 2, gt_c + gt_wh / 2], axis=-1)
    landms = jax.random.uniform(k6, (B, G, 10))
    labels = jnp.broadcast_to(jnp.array([1.0, 1.0, -1.0], jnp.float32), (B, G))
    targets = jnp.concatenate([boxes, landms, labels[..., None]], axis=-1)

    loss_l, loss_c, loss_landm = multibox_loss(
        loc_data, conf_data, landm_data, priors, targets,
        num_classes=C, overlap_thresh=0.35, neg_pos=7)
    jax.block_until_ready((loss_l, loss_c, loss_landm))
    print("KERNEL_OK")
</pallas_src>

<mosaic_0001>
module attributes {stable_mosaic.version = 11 : i64} {
  func.func @_multibox_loss_kernel(%arg0: i32, %arg1: i32, %arg2: memref<1x1x128xi32, #tpu.memory_space<vmem>>, %arg3: memref<1x4x128xf32, #tpu.memory_space<vmem>>, %arg4: memref<1x4x128xf32, #tpu.memory_space<vmem>>, %arg5: memref<1x10x128xf32, #tpu.memory_space<vmem>>, %arg6: memref<1x10x128xf32, #tpu.memory_space<vmem>>, %arg7: memref<1x2x128xf32, #tpu.memory_space<vmem>>, %arg8: memref<1x1x128xf32, #tpu.memory_space<vmem>>, %arg9: memref<1x128xf32, #tpu.memory_space<vmem>>, %arg10: memref<1x128xf32, #tpu.memory_space<vmem>>, %arg11: memref<1x128xf32, #tpu.memory_space<vmem>>, %arg12: memref<1x128xf32, #tpu.memory_space<vmem>>) attributes {dimension_semantics = [#tpu.dimension_semantics<parallel>, #tpu.dimension_semantics<arbitrary>], iteration_bounds = array<i64: 2, 1>, scalar_prefetch = 0 : i64, scratch_operands = 4 : i64, tpu.core_type = #tpu.core_type<tc>, window_params = [{transform_indices = @transform_0, window_bounds = array<i64: 1, 1, 128>}, {transform_indices = @transform_1, window_bounds = array<i64: 1, 4, 128>}, {transform_indices = @transform_2, window_bounds = array<i64: 1, 4, 128>}, {transform_indices = @transform_3, window_bounds = array<i64: 1, 10, 128>}, {transform_indices = @transform_4, window_bounds = array<i64: 1, 10, 128>}, {transform_indices = @transform_5, window_bounds = array<i64: 1, 2, 128>}, {transform_indices = @transform_6, window_bounds = array<i64: 1, 1, 128>}]} {
    %c0 = arith.constant 0 : index
    %c0_0 = arith.constant 0 : index
    %c0_1 = arith.constant 0 : index
    %0 = vector.load %arg2[%c0, %c0_0, %c0_1] : memref<1x1x128xi32, #tpu.memory_space<vmem>>, vector<1x1x128xi32>
    %1 = vector.shape_cast %0 : vector<1x1x128xi32> to vector<1x128xi32>
    %c0_i32 = arith.constant 0 : i32
    %2 = vector.broadcast %c0_i32 : i32 to vector<1x128xi32>
    %3 = arith.cmpi ne, %1, %2 : vector<1x128xi32>
    %4 = tpu.iota {dimensions = array<i32: 1>} : vector<1x128xi32>
    %c128_i32 = arith.constant 128 : i32
    %5 = vector.broadcast %c128_i32 : i32 to vector<1x128xi32>
    %6 = arith.cmpi slt, %4, %5 : vector<1x128xi32>
    %c0_i32_2 = arith.constant 0 : i32
    %7 = arith.cmpi eq, %arg1, %c0_i32_2 : i32
    %8 = arith.extui %7 : i1 to i32
    %c0_i32_3 = arith.constant 0 : i32
    %9 = arith.cmpi ne, %8, %c0_i32_3 : i32
    scf.if %9 {
      %c0_i32_15 = arith.constant 0 : i32
      %40 = vector.broadcast %c0_i32_15 : i32 to vector<1x128xi32>
      %41 = arith.cmpi sgt, %1, %40 : vector<1x128xi32>
      %c0_16 = arith.constant 0 : index
      %c0_17 = arith.constant 0 : index
      %c0_18 = arith.constant 0 : index
      %42 = vector.load %arg3[%c0_16, %c0_17, %c0_18] : memref<1x4x128xf32, #tpu.memory_space<vmem>>, vector<1x4x128xf32>
      %43 = vector.shape_cast %42 : vector<1x4x128xf32> to vector<4x128xf32>
      %c0_19 = arith.constant 0 : index
      %c0_20 = arith.constant 0 : index
      %c0_21 = arith.constant 0 : index
      %44 = vector.load %arg4[%c0_19, %c0_20, %c0_21] : memref<1x4x128xf32, #tpu.memory_space<vmem>>, vector<1x4x128xf32>
      %45 = vector.shape_cast %44 : vector<1x4x128xf32> to vector<4x128xf32>
      %46 = arith.subf %43, %45 : vector<4x128xf32>
      %47 = math.absf %46 : vector<4x128xf32>
      %cst_22 = arith.constant 1.000000e+00 : f32
      %48 = vector.broadcast %cst_22 : f32 to vector<4x128xf32>
      %49 = arith.cmpf olt, %47, %48 : vector<4x128xf32>
      %cst_23 = arith.constant 5.000000e-01 : f32
      %50 = vector.broadcast %cst_23 : f32 to vector<4x128xf32>
      %51 = arith.mulf %50, %46 : vector<4x128xf32>
      %52 = arith.mulf %51, %46 : vector<4x128xf32>
      %cst_24 = arith.constant 5.000000e-01 : f32
      %53 = vector.broadcast %cst_24 : f32 to vector<4x128xf32>
      %54 = arith.subf %47, %53 : vector<4x128xf32>
      %55 = arith.select %49, %52, %54 : vector<4x128xi1>, vector<4x128xf32>
      %cst_25 = arith.constant 0.000000e+00 : f32
      %56 = vector.shape_cast %3 : vector<1x128xi1> to vector<1x128xi1>
      %57 = vector.broadcast %56 : vector<1x128xi1> to vector<4x128xi1>
      %58 = vector.broadcast %cst_25 : f32 to vector<4x128xf32>
      %59 = arith.select %57, %55, %58 : vector<4x128xi1>, vector<4x128xf32>
      %60 = vector.shape_cast %59 : vector<4x128xf32> to vector<1x4x128xf32>
      %cst_26 = arith.constant dense<0.000000e+00> : vector<1xf32>
      %61 = vector.multi_reduction <add>, %60, %cst_26 [1, 2] : vector<1x4x128xf32> to vector<1xf32>
      %62 = vector.shape_cast %61 : vector<1xf32> to vector<1x1x1xf32>
      %63 = vector.extract %62[0, 0, 0] : f32 from vector<1x1x1xf32>
      %c0_27 = arith.constant 0 : index
      %c0_28 = arith.constant 0 : index
      %c0_29 = arith.constant 0 : index
      %64 = vector.load %arg5[%c0_27, %c0_28, %c0_29] : memref<1x10x128xf32, #tpu.memory_space<vmem>>, vector<1x10x128xf32>
      %65 = vector.shape_cast %64 : vector<1x10x128xf32> to vector<10x128xf32>
      %c0_30 = arith.constant 0 : index
      %c0_31 = arith.constant 0 : index
      %c0_32 = arith.constant 0 : index
      %66 = vector.load %arg6[%c0_30, %c0_31, %c0_32] : memref<1x10x128xf32, #tpu.memory_space<vmem>>, vector<1x10x128xf32>
      %67 = vector.shape_cast %66 : vector<1x10x128xf32> to vector<10x128xf32>
      %68 = arith.subf %65, %67 : vector<10x128xf32>
      %69 = math.absf %68 : vector<10x128xf32>
      %cst_33 = arith.constant 1.000000e+00 : f32
      %70 = vector.broadcast %cst_33 : f32 to vector<10x128xf32>
      %71 = arith.cmpf olt, %69, %70 : vector<10x128xf32>
      %cst_34 = arith.constant 5.000000e-01 : f32
      %72 = vector.broadcast %cst_34 : f32 to vector<10x128xf32>
      %73 = arith.mulf %72, %68 : vector<10x128xf32>
      %74 = arith.mulf %73, %68 : vector<10x128xf32>
      %cst_35 = arith.constant 5.000000e-01 : f32
      %75 = vector.broadcast %cst_35 : f32 to vector<10x128xf32>
      %76 = arith.subf %69, %75 : vector<10x128xf32>
      %77 = arith.select %71, %74, %76 : vector<10x128xi1>, vector<10x128xf32>
      %cst_36 = arith.constant 0.000000e+00 : f32
      %78 = vector.shape_cast %41 : vector<1x128xi1> to vector<1x128xi1>
      %79 = vector.broadcast %78 : vector<1x128xi1> to vector<10x128xi1>
      %80 = vector.broadcast %cst_36 : f32 to vector<10x128xf32>
      %81 = arith.select %79, %77, %80 : vector<10x128xi1>, vector<10x128xf32>
      %82 = vector.shape_cast %81 : vector<10x128xf32> to vector<1x10x128xf32>
      %cst_37 = arith.constant dense<0.000000e+00> : vector<1xf32>
      %83 = vector.multi_reduction <add>, %82, %cst_37 [1, 2] : vector<1x10x128xf32> to vector<1xf32>
      %84 = vector.shape_cast %83 : vector<1xf32> to vector<1x1x1xf32>
      %85 = vector.extract %84[0, 0, 0] : f32 from vector<1x1x1xf32>
      %c1_i32 = arith.constant 1 : i32
      %86 = vector.broadcast %c1_i32 : i32 to vector<1x128xi32>
      %87 = arith.select %3, %86, %1 : vector<1x128xi1>, vector<1x128xi32>
      %c0_38 = arith.constant 0 : index
      %c0_39 = arith.constant 0 : index
      %c0_40 = arith.constant 0 : index
      %88 = vector.load %arg7[%c0_38, %c0_39, %c0_40] : memref<1x2x128xf32, #tpu.memory_space<vmem>>, vector<1x1x128xf32>
      %89 = vector.shape_cast %88 : vector<1x1x128xf32> to vector<1x128xf32>
      %c0_41 = arith.constant 0 : index
      %c1 = arith.constant 1 : index
      %c0_42 = arith.constant 0 : index
      %90 = vector.load %arg7[%c0_41, %c1, %c0_42] : memref<1x2x128xf32, #tpu.memory_space<vmem>>, vector<1x1x128xf32>
      %91 = vector.shape_cast %90 : vector<1x1x128xf32> to vector<1x128xf32>
      %92 = arith.maximumf %89, %91 : vector<1x128xf32>
      %93 = arith.minimumf %89, %91 : vector<1x128xf32>
      %94 = arith.subf %93, %92 : vector<1x128xf32>
      %95 = math.exp %94 : vector<1x128xf32>
      %cst_43 = arith.constant 1.000000e+00 : f32
      %96 = vector.broadcast %cst_43 : f32 to vector<1x128xf32>
      %97 = arith.addf %96, %95 : vector<1x128xf32>
      %98 = math.log %97 : vector<1x128xf32>
      %99 = arith.addf %92, %98 : vector<1x128xf32>
      %c1_i32_44 = arith.constant 1 : i32
      %100 = vector.broadcast %c1_i32_44 : i32 to vector<1x128xi32>
      %101 = arith.cmpi eq, %87, %100 : vector<1x128xi32>
      %102 = arith.select %101, %91, %89 : vector<1x128xi1>, vector<1x128xf32>
      %103 = arith.subf %99, %102 : vector<1x128xf32>
      %cst_45 = arith.constant 0.000000e+00 : f32
      %104 = vector.broadcast %cst_45 : f32 to vector<1x128xf32>
      %105 = arith.select %3, %104, %103 : vector<1x128xi1>, vector<1x128xf32>
      %cst_46 = arith.constant -1.000000e+30 : f32
      %106 = vector.broadcast %cst_46 : f32 to vector<1x128xf32>
      %107 = arith.select %6, %105, %106 : vector<1x128xi1>, vector<1x128xf32>
      %c0_47 = arith.constant 0 : index
      %c0_48 = arith.constant 0 : index
      %108 = vector.load %arg9[%c0_47, %c0_48] : memref<1x128xf32, #tpu.memory_space<vmem>>, vector<1x128xf32>
      tpu.vector_store %arg9[%c0_47, %c0_48], %103 {strides = array<i32>} : memref<1x128xf32, #tpu.memory_space<vmem>>, vector<1x128xf32>,
      %c0_49 = arith.constant 0 : index
      %c0_50 = arith.constant 0 : index
      %109 = vector.load %arg10[%c0_49, %c0_50] : memref<1x128xf32, #tpu.memory_space<vmem>>, vector<1x128xf32>
      tpu.vector_store %arg10[%c0_49, %c0_50], %107 {strides = array<i32>} : memref<1x128xf32, #tpu.memory_space<vmem>>, vector<1x128xf32>,
      %cst_51 = arith.constant 0.000000e+00 : f32
      %110 = vector.broadcast %cst_51 : f32 to vector<1x128xf32>
      %c0_52 = arith.constant 0 : index
      %c0_53 = arith.constant 0 : index
      %111 = vector.load %arg11[%c0_52, %c0_53] : memref<1x128xf32, #tpu.memory_space<vmem>>, vector<1x128xf32>
      tpu.vector_store %arg11[%c0_52, %c0_53], %110 {strides = array<i32>} : memref<1x128xf32, #tpu.memory_space<vmem>>, vector<1x128xf32>,
      %112 = arith.extui %3 : vector<1x128xi1> to vector<1x128xi32>
      %113 = arith.sitofp %112 : vector<1x128xi32> to vector<1x128xf32>
      %114 = vector.shape_cast %113 : vector<1x128xf32> to vector<1x1x128xf32>
      %cst_54 = arith.constant dense<0.000000e+00> : vector<1xf32>
      %115 = vector.multi_reduction <add>, %114, %cst_54 [1, 2] : vector<1x1x128xf32> to vector<1xf32>
      %116 = vector.shape_cast %115 : vector<1xf32> to vector<1x1x1xf32>
      %117 = vector.extract %116[0, 0, 0] : f32 from vector<1x1x1xf32>
      %118 = arith.extui %41 : vector<1x128xi1> to vector<1x128xi32>
      %119 = arith.sitofp %118 : vector<1x128xi32> to vector<1x128xf32>
      %120 = vector.shape_cast %119 : vector<1x128xf32> to vector<1x1x128xf32>
      %cst_55 = arith.constant dense<0.000000e+00> : vector<1xf32>
      %121 = vector.multi_reduction <add>, %120, %cst_55 [1, 2] : vector<1x1x128xf32> to vector<1xf32>
      %122 = vector.shape_cast %121 : vector<1xf32> to vector<1x1x1xf32>
      %123 = vector.extract %122[0, 0, 0] : f32 from vector<1x1x1xf32>
      %124 = tpu.iota {dimensions = array<i32: 1>} : vector<1x128xi32>
      %c0_i32_56 = arith.constant 0 : i32
      %125 = vector.broadcast %c0_i32_56 : i32 to vector<1x128xi32>
      %126 = arith.cmpi eq, %124, %125 : vector<1x128xi32>
      %c2_i32 = arith.constant 2 : i32
      %127 = vector.broadcast %c2_i32 : i32 to vector<1x128xi32>
      %128 = arith.cmpi eq, %124, %127 : vector<1x128xi32>
      %c3_i32 = arith.constant 3 : i32
      %129 = vector.broadcast %c3_i32 : i32 to vector<1x128xi32>
      %130 = arith.cmpi eq, %124, %129 : vector<1x128xi32>
      %c4_i32 = arith.constant 4 : i32
      %131 = vector.broadcast %c4_i32 : i32 to vector<1x128xi32>
      %132 = arith.cmpi eq, %124, %131 : vector<1x128xi32>
      %cst_57 = arith.constant 0.000000e+00 : f32
      %133 = vector.broadcast %123 : f32 to vector<1x128xf32>
      %134 = vector.broadcast %cst_57 : f32 to vector<1x128xf32>
      %135 = arith.select %132, %133, %134 : vector<1x128xi1>, vector<1x128xf32>
      %136 = vector.broadcast %117 : f32 to vector<1x128xf32>
      %137 = arith.select %130, %136, %135 : vector<1x128xi1>, vector<1x128xf32>
      %138 = vector.broadcast %85 : f32 to vector<1x128xf32>
      %139 = arith.select %128, %138, %137 : vector<1x128xi1>, vector<1x128xf32>
      %140 = vector.broadcast %63 : f32 to vector<1x128xf32>
      %141 = arith.select %126, %140, %139 : vector<1x128xi1>, vector<1x128xf32>
      %c0_58 = arith.constant 0 : index
      %c0_59 = arith.constant 0 : index
      %142 = vector.load %arg12[%c0_58, %c0_59] : memref<1x128xf32, #tpu.memory_space<vmem>>, vector<1x128xf32>
      tpu.vector_store %arg12[%c0_58, %c0_59], %141 {strides = array<i32>} : memref<1x128xf32, #tpu.memory_space<vmem>>, vector<1x128xf32>,
    } else {
    }
    %c128_i32_4 = arith.constant 128 : i32
    %10 = arith.muli %arg1, %c128_i32_4 : i32
    %11 = tpu.assume_multiple %10, 128 : i32
    %c0_5 = arith.constant 0 : index
    %c0_6 = arith.constant 0 : index
    %12 = vector.load %arg10[%c0_5, %c0_6] : memref<1x128xf32, #tpu.memory_space<vmem>>, vector<1x128xf32>
    %c0_7 = arith.constant 0 : index
    %13 = arith.index_cast %11 : i32 to index
    %14 = vector.load %arg10[%c0_7, %13] : memref<1x128xf32, #tpu.memory_space<vmem>>, vector<1x128xf32>
    %15 = vector.shape_cast %14 : vector<1x128xf32> to vector<128x1xf32>
    %16 = tpu.iota {dimensions = array<i32: 0>} : vector<128x128xi32>
    %17 = vector.broadcast %11 : i32 to vector<128x128xi32>
    %18 = arith.addi %17, %16 : vector<128x128xi32>
    %19 = tpu.iota {dimensions = array<i32: 1>} : vector<128x128xi32>
    %20 = vector.broadcast %15 : vector<128x1xf32> to vector<128x128xf32>
    %21 = vector.broadcast %12 : vector<1x128xf32> to vector<128x128xf32>
    %22 = arith.cmpf ogt, %20, %21 : vector<128x128xf32>
    %23 = vector.broadcast %15 : vector<128x1xf32> to vector<128x128xf32>
    %24 = vector.broadcast %12 : vector<1x128xf32> to vector<128x128xf32>
    %25 = arith.cmpf oeq, %23, %24 : vector<128x128xf32>
    %26 = arith.cmpi slt, %18, %19 : vector<128x128xi32>
    %27 = arith.andi %25, %26 : vector<128x128xi1>
    %28 = arith.ori %22, %27 : vector<128x128xi1>
    %cst = arith.constant 1.000000e+00 : bf16
    %29 = vector.broadcast %cst : bf16 to vector<1x128xbf16>
    %c0_8 = arith.constant 0 : index
    %c0_9 = arith.constant 0 : index
    %30 = vector.load %arg11[%c0_8, %c0_9] : memref<1x128xf32, #tpu.memory_space<vmem>>, vector<1x128xf32>
    %31 = arith.extui %28 : vector<128x128xi1> to vector<128x128xi32>
    %32 = arith.sitofp %31 : vector<128x128xi32> to vector<128x128xf32>
    %33 = arith.truncf %32 : vector<128x128xf32> to vector<128x128xbf16>
    %cst_10 = arith.constant dense<0.000000e+00> : vector<1x128xf32>
    %34 = tpu.matmul %29, %33, %cst_10 {dimension_numbers = #tpu.dot_dimension_numbers<[1], [0], [0], [1], [0, 0, 1, 1], [], []>} : vector<1x128xbf16>, vector<128x128xbf16>, vector<1x128xf32> -> vector<1x128xf32>
    %35 = arith.addf %30, %34 : vector<1x128xf32>
    %c0_11 = arith.constant 0 : index
    %c0_12 = arith.constant 0 : index
    %36 = vector.load %arg11[%c0_11, %c0_12] : memref<1x128xf32, #tpu.memory_space<vmem>>, vector<1x128xf32>
    tpu.vector_store %arg11[%c0_11, %c0_12], %35 {strides = array<i32>} : memref<1x128xf32, #tpu.memory_space<vmem>>, vector<1x128xf32>,
    %c0_i32_13 = arith.constant 0 : i32
    %37 = arith.cmpi eq, %arg1, %c0_i32_13 : i32
    %38 = arith.extui %37 : i1 to i32
    %c0_i32_14 = arith.constant 0 : i32
    %39 = arith.cmpi ne, %38, %c0_i32_14 : i32
    scf.if %39 {
      %40 = arith.extui %3 : vector<1x128xi1> to vector<1x128xi32>
      %41 = arith.sitofp %40 : vector<1x128xi32> to vector<1x128xf32>
      %42 = vector.shape_cast %41 : vector<1x128xf32> to vector<1x1x128xf32>
      %cst_15 = arith.constant dense<0.000000e+00> : vector<1xf32>
      %43 = vector.multi_reduction <add>, %42, %cst_15 [1, 2] : vector<1x1x128xf32> to vector<1xf32>
      %44 = vector.shape_cast %43 : vector<1xf32> to vector<1x1x1xf32>
      %45 = vector.extract %44[0, 0, 0] : f32 from vector<1x1x1xf32>
      %cst_16 = arith.constant 7.000000e+00 : f32
      %46 = arith.mulf %cst_16, %45 : f32
      %cst_17 = arith.constant 1.270000e+02 : f32
      %47 = arith.minimumf %46, %cst_17 : f32
      %c0_18 = arith.constant 0 : index
      %c0_19 = arith.constant 0 : index
      %48 = vector.load %arg11[%c0_18, %c0_19] : memref<1x128xf32, #tpu.memory_space<vmem>>, vector<1x128xf32>
      %49 = vector.broadcast %47 : f32 to vector<1x128xf32>
      %50 = arith.cmpf olt, %48, %49 : vector<1x128xf32>
      %51 = arith.ori %3, %50 : vector<1x128xi1>
      %c0_20 = arith.constant 0 : index
      %c0_21 = arith.constant 0 : index
      %52 = vector.load %arg9[%c0_20, %c0_21] : memref<1x128xf32, #tpu.memory_space<vmem>>, vector<1x128xf32>
      %cst_22 = arith.constant 0.000000e+00 : f32
      %53 = vector.broadcast %cst_22 : f32 to vector<1x128xf32>
      %54 = arith.select %51, %52, %53 : vector<1x128xi1>, vector<1x128xf32>
      %55 = vector.shape_cast %54 : vector<1x128xf32> to vector<1x1x128xf32>
      %cst_23 = arith.constant dense<0.000000e+00> : vector<1xf32>
      %56 = vector.multi_reduction <add>, %55, %cst_23 [1, 2] : vector<1x1x128xf32> to vector<1xf32>
      %57 = vector.shape_cast %56 : vector<1xf32> to vector<1x1x1xf32>
      %58 = vector.extract %57[0, 0, 0] : f32 from vector<1x1x1xf32>
      %59 = tpu.iota {dimensions = array<i32: 1>} : vector<1x128xi32>
      %c1_i32 = arith.constant 1 : i32
      %60 = vector.broadcast %c1_i32 : i32 to vector<1x128xi32>
      %61 = arith.cmpi eq, %59, %60 : vector<1x128xi32>
      %c0_24 = arith.constant 0 : index
      %c0_25 = arith.constant 0 : index
      %62 = vector.load %arg12[%c0_24, %c0_25] : memref<1x128xf32, #tpu.memory_space<vmem>>, vector<1x128xf32>
      %63 = vector.broadcast %58 : f32 to vector<1x128xf32>
      %64 = arith.select %61, %63, %62 : vector<1x128xi1>, vector<1x128xf32>
      %c0_26 = arith.constant 0 : index
      %c0_27 = arith.constant 0 : index
      %c0_28 = arith.constant 0 : index
      %65 = vector.load %arg8[%c0_26, %c0_27, %c0_28] : memref<1x1x128xf32, #tpu.memory_space<vmem>>, vector<1x1x128xf32>
      %66 = vector.shape_cast %65 : vector<1x1x128xf32> to vector<1x128xf32>
      %67 = vector.shape_cast %64 : vector<1x128xf32> to vector<1x1x128xf32>
      tpu.vector_store %arg8[%c0_26, %c0_27, %c0_28], %67 {strides = array<i32>} : memref<1x1x128xf32, #tpu.memory_space<vmem>>, vector<1x1x128xf32>,
    } else {
    }
    return
  }
  func.func @transform_0(%arg0: i32, %arg1: i32) -> (i32, i32, i32) {
    %c0_i32 = arith.constant 0 : i32
    %c0_i32_0 = arith.constant 0 : i32
    %c0_i32_1 = arith.constant 0 : i32
    return %arg0, %c0_i32, %c0_i32_0 : i32, i32, i32
  }
  func.func @transform_1(%arg0: i32, %arg1: i32) -> (i32, i32, i32) {
    %c0_i32 = arith.constant 0 : i32
    %c0_i32_0 = arith.constant 0 : i32
    %c0_i32_1 = arith.constant 0 : i32
    return %arg0, %c0_i32, %c0_i32_0 : i32, i32, i32
  }
  func.func @transform_2(%arg0: i32, %arg1: i32) -> (i32, i32, i32) {
    %c0_i32 = arith.constant 0 : i32
    %c0_i32_0 = arith.constant 0 : i32
    %c0_i32_1 = arith.constant 0 : i32
    return %arg0, %c0_i32, %c0_i32_0 : i32, i32, i32
  }
  func.func @transform_3(%arg0: i32, %arg1: i32) -> (i32, i32, i32) {
    %c0_i32 = arith.constant 0 : i32
    %c0_i32_0 = arith.constant 0 : i32
    %c0_i32_1 = arith.constant 0 : i32
    return %arg0, %c0_i32, %c0_i32_0 : i32, i32, i32
  }
  func.func @transform_4(%arg0: i32, %arg1: i32) -> (i32, i32, i32) {
    %c0_i32 = arith.constant 0 : i32
    %c0_i32_0 = arith.constant 0 : i32
    %c0_i32_1 = arith.constant 0 : i32
    return %arg0, %c0_i32, %c0_i32_0 : i32, i32, i32
  }
  func.func @transform_5(%arg0: i32, %arg1: i32) -> (i32, i32, i32) {
    %c0_i32 = arith.constant 0 : i32
    %c0_i32_0 = arith.constant 0 : i32
    %c0_i32_1 = arith.constant 0 : i32
    return %arg0, %c0_i32, %c0_i32_0 : i32, i32, i32
  }
  func.func @transform_6(%arg0: i32, %arg1: i32) -> (i32, i32, i32) {
    %c0_i32 = arith.constant 0 : i32
    %c0_i32_0 = arith.constant 0 : i32
    %c0_i32_1 = arith.constant 0 : i32
    return %arg0, %c0_i32, %c0_i32_0 : i32, i32, i32
  }
}

</mosaic_0001>

<llo_original>
// kernel: multibox_loss.1
$region0: #{multibox_loss.1}
  #allocation0 [shape = 'u32[]', space=smem, size = 0x4, offset = 0x4, fixed_abs, tag = 'smem constant byte address 0x4 - core index']
  #allocation1 [shape = 'u32[72,128]{1,0:T(1,128)}', space=vmem, size = 0x9000, scoped, tag = 'internal scratch']
  #allocation2 [shape = 'f32[1,128]{1,0:T(1,128)}', space=vmem, size = 0x200, scoped, tag = 'scratch operand']
  #allocation3 [shape = 'f32[1,128]{1,0:T(1,128)}', space=vmem, size = 0x200, scoped, tag = 'scratch operand']
  #allocation4 [shape = 'f32[1,128]{1,0:T(1,128)}', space=vmem, size = 0x200, scoped, tag = 'scratch operand']
  #allocation5 [shape = 'f32[1,128]{1,0:T(1,128)}', space=vmem, size = 0x200, scoped, tag = 'scratch operand']
  %s0 = inlined_call_operand.vmem [shape: s32[2,1,128], index: 0, kind: input, shape index: {}]
  %s1 = inlined_call_operand.vmem [shape: f32[2,4,128], index: 1, kind: input, shape index: {}]
  %s2 = inlined_call_operand.vmem [shape: f32[2,4,128], index: 2, kind: input, shape index: {}]
  %s3 = inlined_call_operand.vmem [shape: f32[2,10,128], index: 3, kind: input, shape index: {}]
  %s4 = inlined_call_operand.vmem [shape: f32[2,10,128], index: 4, kind: input, shape index: {}]
  %s5 = inlined_call_operand.vmem [shape: f32[2,2,128], index: 5, kind: input, shape index: {}]
  %s6 = inlined_call_operand.vmem [shape: f32[2,1,128], index: 6, kind: output, shape index: {}]
  %s7 = sld [smem:[#allocation0]]
  $region65: #{multibox_loss.1} parent=0
    _
  %s9 = ssub.s32 1, %s7
  %s10 = scalar_select 0, %s9, %s7
  loop: start=0, step=1, limit=4
  $region2: #{multibox_loss.1} parent=0 // loop_pre_header
    _
  $region3: #{multibox_loss.1} parent=0 // loop_header
    %s12 = sphi 0, %s16
    %p13 = scmp.ge.s32.totalorder %s12, 4
    %s19 = sphi 0, %s31
    %s20 = sphi 0, %s27
    %s21 = sphi 0, %s19
    %s22 = sphi 0, %s20
    %s23 = sphi 0, %s21
    %s24 = sphi 0, %s22
    %s34 = sphi 0, %s36
    %s37 = sphi 0, %s34
    %s38 = sphi 0, %s37
    %s54 = sphi 0, %s38
    %s60 = sphi 0, %s62
    %s63 = sphi 0, %s60
    %s64 = sphi 0, %s63
    %s80 = sphi 0, %s64
    %s86 = sphi 0, %s88
    %s89 = sphi 0, %s86
    %s90 = sphi 0, %s89
    %s106 = sphi 0, %s90
    %s112 = sphi 0, %s114
    %s115 = sphi 0, %s112
    %s116 = sphi 0, %s115
    %s132 = sphi 0, %s116
    %s138 = sphi 0, %s140
    %s141 = sphi 0, %s138
    %s142 = sphi 0, %s141
    %s158 = sphi 0, %s142
    %s164 = sphi 0, %s166
    %s167 = sphi 0, %s164
    %s168 = sphi 0, %s167
    %s184 = sphi 0, %s168
    %s190 = sphi 0, %s192
    %s193 = sphi 0, %s190
    %s194 = sphi 0, %s193
    %s210 = sphi 0, %s194
  $region4: #{multibox_loss.1} parent=0 // loop_header_branch
    %15 = sbr.rel (%p13) target = $region8
  $region5: #{multibox_loss.1} parent=0 // loop_body
    %s17 = ssub.s32 %s12, 1
    %s18 = ssub.s32 %s12, 2
    %s25 = sadd.s32 1, %s20
    %p26 = scmp.ge.s32.totalorder %s25, 1
    %s27 = scalar_select %p26, 0, %s25
    %s28 = sadd.s32 1, %s19
    %s29 = scalar_select %p26, %s28, %s19
    %p30 = scmp.ge.s32.totalorder %s29, 2
    %s31 = scalar_select %p30, 0, %s29
    %s32 = ssub.s32 %s19, %s31
    %p33 = scmp.eq.s32.totalorder %s32, 0
    %s35 = sadd.s32 %s34, 1
    %s36 = scalar_select %p33, %s34, %s35
    %p39 = pneg %p33
    %p40 = scmp.eq.s32.totalorder %s12, 1
    %p41 = por %p39, %p40
    %p42 = scmp.ne.s32.totalorder %s34, %s37
    %p43 = scmp.eq.s32.totalorder %s12, 0
    %p44 = por %p42, %p43
    %p45 = scmp.ne.s32.totalorder %s34, %s37
    %p46 = scmp.eq.s32.totalorder %s17, 1
    %p47 = por %p45, %p46
    %p48 = scmp.ne.s32.totalorder %s37, %s38
    %p49 = scmp.eq.s32.totalorder %s17, 0
    %p50 = por %p48, %p49
    %p51 = scmp.ne.s32.totalorder %s37, %s38
    %p52 = scmp.eq.s32.totalorder %s18, 1
    %p53 = por %p51, %p52
    %p55 = scmp.ne.s32.totalorder %s38, %s54
    %p56 = scmp.eq.s32.totalorder %s18, 0
    %p57 = por %p55, %p56
    %s58 = ssub.s32 %s19, %s31
    %p59 = scmp.eq.s32.totalorder %s58, 0
    %s61 = sadd.s32 %s60, 1
    %s62 = scalar_select %p59, %s60, %s61
    %p65 = pneg %p59
    %p66 = scmp.eq.s32.totalorder %s12, 1
    %p67 = por %p65, %p66
    %p68 = scmp.ne.s32.totalorder %s60, %s63
    %p69 = scmp.eq.s32.totalorder %s12, 0
    %p70 = por %p68, %p69
    %p71 = scmp.ne.s32.totalorder %s60, %s63
    %p72 = scmp.eq.s32.totalorder %s17, 1
    %p73 = por %p71, %p72
    %p74 = scmp.ne.s32.totalorder %s63, %s64
    %p75 = scmp.eq.s32.totalorder %s17, 0
    %p76 = por %p74, %p75
    %p77 = scmp.ne.s32.totalorder %s63, %s64
    %p78 = scmp.eq.s32.totalorder %s18, 1
    %p79 = por %p77, %p78
    %p81 = scmp.ne.s32.totalorder %s64, %s80
    %p82 = scmp.eq.s32.totalorder %s18, 0
    %p83 = por %p81, %p82
    %s84 = ssub.s32 %s19, %s31
    %p85 = scmp.eq.s32.totalorder %s84, 0
    %s87 = sadd.s32 %s86, 1
    %s88 = scalar_select %p85, %s86, %s87
    %p91 = pneg %p85
    %p92 = scmp.eq.s32.totalorder %s12, 1
    %p93 = por %p91, %p92
    %p94 = scmp.ne.s32.totalorder %s86, %s89
    %p95 = scmp.eq.s32.totalorder %s12, 0
    %p96 = por %p94, %p95
    %p97 = scmp.ne.s32.totalorder %s86, %s89
    %p98 = scmp.eq.s32.totalorder %s17, 1
    %p99 = por %p97, %p98
    %p100 = scmp.ne.s32.totalorder %s89, %s90
    %p101 = scmp.eq.s32.totalorder %s17, 0
    %p102 = por %p100, %p101
    %p103 = scmp.ne.s32.totalorder %s89, %s90
    %p104 = scmp.eq.s32.totalorder %s18, 1
    %p105 = por %p103, %p104
    %p107 = scmp.ne.s32.totalorder %s90, %s106
    %p108 = scmp.eq.s32.totalorder %s18, 0
    %p109 = por %p107, %p108
    %s110 = ssub.s32 %s19, %s31
    %p111 = scmp.eq.s32.totalorder %s110, 0
    %s113 = sadd.s32 %s112, 1
    %s114 = scalar_select %p111, %s112, %s113
    %p117 = pneg %p111
    %p118 = scmp.eq.s32.totalorder %s12, 1
    %p119 = por %p117, %p118
    %p120 = scmp.ne.s32.totalorder %s112, %s115
    %p121 = scmp.eq.s32.totalorder %s12, 0
    %p122 = por %p120, %p121
    %p123 = scmp.ne.s32.totalorder %s112, %s115
    %p124 = scmp.eq.s32.totalorder %s17, 1
    %p125 = por %p123, %p124
    %p126 = scmp.ne.s32.totalorder %s115, %s116
    %p127 = scmp.eq.s32.totalorder %s17, 0
    %p128 = por %p126, %p127
    %p129 = scmp.ne.s32.totalorder %s115, %s116
    %p130 = scmp.eq.s32.totalorder %s18, 1
    %p131 = por %p129, %p130
    %p133 = scmp.ne.s32.totalorder %s116, %s132
    %p134 = scmp.eq.s32.totalorder %s18, 0
    %p135 = por %p133, %p134
    %s136 = ssub.s32 %s19, %s31
    %p137 = scmp.eq.s32.totalorder %s136, 0
    %s139 = sadd.s32 %s138, 1
    %s140 = scalar_select %p137, %s138, %s139
    %p143 = pneg %p137
    %p144 = scmp.eq.s32.totalorder %s12, 1
    %p145 = por %p143, %p144
    %p146 = scmp.ne.s32.totalorder %s138, %s141
    %p147 = scmp.eq.s32.totalorder %s12, 0
    %p148 = por %p146, %p147
    %p149 = scmp.ne.s32.totalorder %s138, %s141
    %p150 = scmp.eq.s32.totalorder %s17, 1
    %p151 = por %p149, %p150
    %p152 = scmp.ne.s32.totalorder %s141, %s142
    %p153 = scmp.eq.s32.totalorder %s17, 0
    %p154 = por %p152, %p153
    %p155 = scmp.ne.s32.totalorder %s141, %s142
    %p156 = scmp.eq.s32.totalorder %s18, 1
    %p157 = por %p155, %p156
    %p159 = scmp.ne.s32.totalorder %s142, %s158
    %p160 = scmp.eq.s32.totalorder %s18, 0
    %p161 = por %p159, %p160
    %s162 = ssub.s32 %s19, %s31
    %p163 = scmp.eq.s32.totalorder %s162, 0
    %s165 = sadd.s32 %s164, 1
    %s166 = scalar_select %p163, %s164, %s165
    %p169 = pneg %p163
    %p170 = scmp.eq.s32.totalorder %s12, 1
    %p171 = por %p169, %p170
    %p172 = scmp.ne.s32.totalorder %s164, %s167
    %p173 = scmp.eq.s32.totalorder %s12, 0
    %p174 = por %p172, %p173
    %p175 = scmp.ne.s32.totalorder %s164, %s167
    %p176 = scmp.eq.s32.totalorder %s17, 1
    %p177 = por %p175, %p176
    %p178 = scmp.ne.s32.totalorder %s167, %s168
    %p179 = scmp.eq.s32.totalorder %s17, 0
    %p180 = por %p178, %p179
    %p181 = scmp.ne.s32.totalorder %s167, %s168
    %p182 = scmp.eq.s32.totalorder %s18, 1
    %p183 = por %p181, %p182
    %p185 = scmp.ne.s32.totalorder %s168, %s184
    %p186 = scmp.eq.s32.totalorder %s18, 0
    %p187 = por %p185, %p186
    %s188 = ssub.s32 %s19, %s31
    %p189 = scmp.eq.s32.totalorder %s188, 0
    %s191 = sadd.s32 %s190, 1
    %s192 = scalar_select %p189, %s190, %s191
    %p195 = pneg %p189
    %p196 = scmp.eq.s32.totalorder %s12, 1
    %p197 = por %p195, %p196
    %p198 = scmp.ne.s32.totalorder %s190, %s193
    %p199 = scmp.eq.s32.totalorder %s12, 0
    %p200 = por %p198, %p199
    %p201 = scmp.ne.s32.totalorder %s190, %s193
    %p202 = scmp.eq.s32.totalorder %s17, 1
    %p203 = por %p201, %p202
    %p204 = scmp.ne.s32.totalorder %s193, %s194
    %p205 = scmp.eq.s32.totalorder %s17, 0
    %p206 = por %p204, %p205
    %p207 = scmp.ne.s32.totalorder %s193, %s194
    %p208 = scmp.eq.s32.totalorder %s18, 1
    %p209 = por %p207, %p208
    %p211 = scmp.ne.s32.totalorder %s194, %s210
    %p212 = scmp.eq.s32.totalorder %s18, 0
    %p213 = por %p211, %p212
    %p214 = scmp.le.s32.totalorder 1, %s12
    %p215 = scmp.lt.s32.totalorder %s12, 3
    %p216 = pnand %p214, %p215
    %p217 = pneg %p216
    // Predicated region
    $region9: #{multibox_loss.1} parent=5 // pred_check
      _
    $region10: #{multibox_loss.1} parent=5 // pred_check_branch
      %219 = sbr.rel (%p216) target = $region12
    $region11: #{multibox_loss.1} parent=5 // pred_region
      %s220 = ssub.s32 %s12, 1
    $region12: #{multibox_loss.1} parent=5 // pred_fallthru
      _
    %p221 = scmp.lt.s32.totalorder %s12, 2
    // Predicated region
    $region13: #{multibox_loss.1} parent=5 // pred_check
      %p222 = pneg %p221
    $region14: #{multibox_loss.1} parent=5 // pred_check_branch
      %224 = sbr.rel (%p222) target = $region16
    $region15: #{multibox_loss.1} parent=5 // pred_region
      // Predicated region
      $region17: #{multibox_loss.1} parent=15 // pred_check
        %p225 = pneg %p44
      $region18: #{multibox_loss.1} parent=15 // pred_check_branch
        %227 = sbr.rel (%p225) target = $region20
      $region19: #{multibox_loss.1} parent=15 // pred_region
        %p228 = scmp.lt.s32.totalorder %s19, 1
        %s229 = scalar_select %p228, %s19, 1
        %s230 = scalar_lea.vmem %s0, %s229
      $region20: #{multibox_loss.1} parent=15 // pred_fallthru
        _
      // Predicated region
      $region21: #{multibox_loss.1} parent=15 // pred_check
        %p231 = pneg %p70
      $region22: #{multibox_loss.1} parent=15 // pred_check_branch
        %233 = sbr.rel (%p231) target = $region24
      $region23: #{multibox_loss.1} parent=15 // pred_region
        %p234 = scmp.lt.s32.totalorder %s19, 1
        %s235 = scalar_select %p234, %s19, 1
        %s236 = smul.addr %s235, 4
        %s237 = scalar_lea.vmem %s1, %s236
      $region24: #{multibox_loss.1} parent=15 // pred_fallthru
        _
      // Predicated region
      $region25: #{multibox_loss.1} parent=15 // pred_check
        %p238 = pneg %p96
      $region26: #{multibox_loss.1} parent=15 // pred_check_branch
        %240 = sbr.rel (%p238) target = $region28
      $region27: #{multibox_loss.1} parent=15 // pred_region
        %p241 = scmp.lt.s32.totalorder %s19, 1
        %s242 = scalar_select %p241, %s19, 1
        %s243 = smul.addr %s242, 4
        %s244 = scalar_lea.vmem %s2, %s243
      $region28: #{multibox_loss.1} parent=15 // pred_fallthru
        _
      // Predicated region
      $region29: #{multibox_loss.1} parent=15 // pred_check
        %p245 = pneg %p122
      $region30: #{multibox_loss.1} parent=15 // pred_check_branch
        %247 = sbr.rel (%p245) target = $region32
      $region31: #{multibox_loss.1} parent=15 // pred_region
        %p248 = scmp.lt.s32.totalorder %s19, 1
        %s249 = scalar_select %p248, %s19, 1
        %s250 = smul.addr %s249, 2
        %s251 = smul.addr %s250, 8
        %s252 = scalar_lea.vmem %s3, %s251
      $region32: #{multibox_loss.1} parent=15 // pred_fallthru
        _
      // Predicated region
      $region33: #{multibox_loss.1} parent=15 // pred_check
        %p253 = pneg %p148
      $region34: #{multibox_loss.1} parent=15 // pred_check_branch
        %255 = sbr.rel (%p253) target = $region36
      $region35: #{multibox_loss.1} parent=15 // pred_region
        %p256 = scmp.lt.s32.totalorder %s19, 1
        %s257 = scalar_select %p256, %s19, 1
        %s258 = smul.addr %s257, 2
        %s259 = smul.addr %s258, 8
        %s260 = scalar_lea.vmem %s4, %s259
      $region36: #{multibox_loss.1} parent=15 // pred_fallthru
        _
      // Predicated region
      $region37: #{multibox_loss.1} parent=15 // pred_check
        %p261 = pneg %p174
      $region38: #{multibox_loss.1} parent=15 // pred_check_branch
        %263 = sbr.rel (%p261) target = $region40
      $region39: #{multibox_loss.1} parent=15 // pred_region
        %p264 = scmp.lt.s32.totalorder %s19, 1
        %s265 = scalar_select %p264, %s19, 1
        %s266 = smul.addr %s265, 2
        %s267 = scalar_lea.vmem %s5, %s266
      $region40: #{multibox_loss.1} parent=15 // pred_fallthru
        _
    $region16: #{multibox_loss.1} parent=5 // pred_fallthru
      _
    %p268 = scmp.le.s32.totalorder 1, %s12
    %p269 = scmp.lt.s32.totalorder %s12, 3
    %p270 = pnand %p268, %p269
    %p271 = pneg %p270
    // Predicated region
    $region41: #{multibox_loss.1} parent=5 // pred_check
      _
    $region42: #{multibox_loss.1} parent=5 // pred_check_branch
      %273 = sbr.rel (%p270) target = $region44
    $region43: #{multibox_loss.1} parent=5 // pred_region
      %s274 = ssub.s32 %s12, 1
      %p275 = scmp.lt.s32.totalorder %s21, 1
      %s276 = scalar_select %p275, %s21, 1
      %s277 = scalar_lea.vmem %s0, %s276
      %p278 = pneg %p50
      %p279 = pneg %p47
      %p280 = scmp.lt.s32.totalorder %s21, 1
      %s281 = scalar_select %p280, %s21, 1
      %s282 = smul.addr %s281, 4
      %s283 = scalar_lea.vmem %s1, %s282
      %p284 = pneg %p76
      %p285 = pneg %p73
      %p286 = scmp.lt.s32.totalorder %s21, 1
      %s287 = scalar_select %p286, %s21, 1
      %s288 = smul.addr %s287, 4
      %s289 = scalar_lea.vmem %s2, %s288
      %p290 = pneg %p102
      %p291 = pneg %p99
      %p292 = scmp.lt.s32.totalorder %s21, 1
      %s293 = scalar_select %p292, %s21, 1
      %s294 = smul.addr %s293, 2
      %s295 = smul.addr %s294, 8
      %s296 = scalar_lea.vmem %s3, %s295
      %p297 = pneg %p128
      %p298 = pneg %p125
      %p299 = scmp.lt.s32.totalorder %s21, 1
      %s300 = scalar_select %p299, %s21, 1
      %s301 = smul.addr %s300, 2
      %s302 = smul.addr %s301, 8
      %s303 = scalar_lea.vmem %s4, %s302
      %p304 = pneg %p154
      %p305 = pneg %p151
      %p306 = scmp.lt.s32.totalorder %s21, 1
      %s307 = scalar_select %p306, %s21, 1
      %s308 = smul.addr %s307, 2
      %s309 = scalar_lea.vmem %s5, %s308
      %p310 = pneg %p180
      %p311 = pneg %p177
      %p312 = pneg %p206
      %p313 = pneg %p203
      %p314 = scmp.lt.s32.totalorder %s21, 1
      %s315 = scalar_select %p314, %s21, 1
      %s316 = scalar_lea.vmem %s6, %s315
      %p317 = scmp.lt.s32.totalorder %s21, 1
      %s318 = scalar_select %p317, %s21, 1
      %s319 = scalar_lea.vmem %s0, %s318
      %p320 = scmp.lt.s32.totalorder %s21, 1
      %s321 = scalar_select %p320, %s21, 1
      %s322 = smul.addr %s321, 4
      %s323 = scalar_lea.vmem %s1, %s322
      %p324 = scmp.lt.s32.totalorder %s21, 1
      %s325 = scalar_select %p324, %s21, 1
      %s326 = smul.addr %s325, 4
      %s327 = scalar_lea.vmem %s2, %s326
      %p328 = scmp.lt.s32.totalorder %s21, 1
      %s329 = scalar_select %p328, %s21, 1
      %s330 = smul.addr %s329, 2
      %s331 = smul.addr %s330, 8
      %s332 = scalar_lea.vmem %s3, %s331
      %p333 = scmp.lt.s32.totalorder %s21, 1
      %s334 = scalar_select %p333, %s21, 1
      %s335 = smul.addr %s334, 2
      %s336 = smul.addr %s335, 8
      %s337 = scalar_lea.vmem %s4, %s336
      %p338 = scmp.lt.s32.totalorder %s21, 1
      %s339 = scalar_select %p338, %s21, 1
      %s340 = smul.addr %s339, 2
      %s341 = scalar_lea.vmem %s5, %s340
      %p342 = scmp.lt.s32.totalorder %s21, 1
      %s343 = scalar_select %p342, %s21, 1
      %s344 = scalar_lea.vmem %s6, %s343
      %v346 = vld [vmem:[%s319] sm:$0x1]
      %vm347 = vcmp.ne.s32.totalorder %v346, 0
      %v348 = vlaneseq
      %v349 = vand.u32 %v348, 127
      %vm350 = vcmp.lt.s32.totalorder %v349, 128
      %p351 = scmp.eq.s32.totalorder %s22, 0
      // Predicated region
      $region45: #{multibox_loss.1} parent=43 // pred_check
        %p352 = pneg %p351
      $region46: #{multibox_loss.1} parent=43 // pred_check_branch
        %354 = sbr.rel (%p352) target = $region48
      $region47: #{multibox_loss.1} parent=43 // pred_region
        %vm355 = vcmp.gt.s32.totalorder %v346, 0
        %v356 = vld [vmem:[%s323] sm:$0xf]
        %v357 = vld [vmem:[%s327] sm:$0xf]
        %v358 = vsub.f32 %v356, %v357
        %v359 = vand.u32 2147483647, %v358
        %vm360 = vcmp.lt.f32.partialorder %v359, 1.0
        %v361 = vmul.f32 %v358, 0.5
        %v362 = vmul.f32 %v361, %v358
        %v363 = vsub.f32 %v359, 0.5
        %v364 = vsel %vm360, %v362, %v363
        %v365 = vsel %vm347, 1, 0
        %v366 = vperm.slane %v365, 0
        %vm367 = vcmp.eq.s32.totalorder %v366, 1
        %v368 = vsel %vm367, %v364, 0.0
        %vm369 = vcmask 1043456
        %v370 = vsel %vm369, %v368, 0.0
        %371 = vadd.xlane.f32.xlu0 %v370
        %v372 = vpop.xlane.xlu0 %371
        %v373 = vrot.slane %v372, 4
        %v374 = vadd.f32 %v372, %v373
        %v375 = vrot.slane %v374, 2
        %v376 = vadd.f32 %v374, %v375
        %v377 = vrot.slane %v376, 1
        %v378 = vadd.f32 %v376, %v377
        %s379 = vtos %v378
        %v380 = vld [vmem:[%s332] sm:$0xff]
        %v381 = vld [vmem:[%s332 + $0x8] sm:$0x3]
        %v382 = vld [vmem:[%s337] sm:$0xff]
        %v383 = vld [vmem:[%s337 + $0x8] sm:$0x3]
        %v384 = vsub.f32 %v380, %v382
        %v385 = vsub.f32 %v381, %v383
        %v386 = vand.u32 2147483647, %v384
        %v387 = vand.u32 2147483647, %v385
        %vm388 = vcmp.lt.f32.partialorder %v386, 1.0
        %vm389 = vcmp.lt.f32.partialorder %v387, 1.0
        %v390 = vmul.f32 %v384, 0.5
        %v391 = vmul.f32 %v385, 0.5
        %v392 = vmul.f32 %v390, %v384
        %v393 = vmul.f32 %v391, %v385
        %v394 = vsub.f32 %v386, 0.5
        %v395 = vsub.f32 %v387, 0.5
        %v396 = vsel %vm388, %v392, %v394
        %v397 = vsel %vm389, %v393, %v395
        %v398 = vsel %vm355, 1, 0
        %v399 = vperm.slane %v398, 0
        %vm400 = vcmp.eq.s32.totalorder %v399, 1
        %v401 = vsel %vm400, %v396, 0.0
        %v402 = vsel %vm400, %v397, 0.0
        %vm403 = vcmask 1041408
        %v404 = vsel %vm403, %v402, 0.0
        %v405 = vadd.f32 %v401, %v404
        %406 = vadd.xlane.f32.xlu0 %v405
        %v407 = vpop.xlane.xlu0 %406
        %v408 = vrot.slane %v407, 4
        %v409 = vadd.f32 %v407, %v408
        %v410 = vrot.slane %v409, 2
        %v411 = vadd.f32 %v409, %v410
        %v412 = vrot.slane %v411, 1
        %v413 = vadd.f32 %v411, %v412
        %s414 = vtos %v413
        %v415 = vsel %vm347, 1, %v346
        %v416 = vld [vmem:[%s341] sm:$0x1]
        %v417 = vld [vmem:[%s341 + $0x1] sm:$0x1]
        %v418 = vmax.f32 %v416, %v417
        %v419 = vmin.f32 %v416, %v417
        %v420 = vsub.f32 %v419, %v418
        %v421 = vmul.f32 %v420, 1.442695
        %v422 = vpow.pop %v421
        %v423 = vadd.f32 %v422, 1.0
        %v424 = vlog2.pop %v423
        %v425 = vmul.f32 %v424, 0.6931472
        %v426 = vadd.f32 %v418, %v425
        %vm427 = vcmp.eq.s32.totalorder %v415, 1
        %v428 = vsel %vm427, %v417, %v416
        %v429 = vsub.f32 %v426, %v428
        %v430 = vsel %vm347, 0.0, %v429
        %v431 = vsel %vm350, %v430, -1e+30
        %432 = vst [vmem:[#allocation2] sm:$0x1] %v429
        %433 = vst [vmem:[#allocation3] sm:$0x1] %v431
        %434 = vst [vmem:[#allocation4] sm:$0x1] 0.0
        %v435 = vcvt.s32.f32 %v365
        %vm436 = vcmask 1040384
        %v437 = vsel %vm436, %v435, 0.0
        %438 = vadd.xlane.f32.xlu0 %v437
        %v439 = vpop.xlane.xlu0 %438
        %v440 = vrot.slane %v439, 4
        %v441 = vadd.f32 %v439, %v440
        %v442 = vrot.slane %v441, 2
        %v443 = vadd.f32 %v441, %v442
        %v444 = vrot.slane %v443, 1
        %v445 = vadd.f32 %v443, %v444
        %s446 = vtos %v445
        %v447 = vcvt.s32.f32 %v398
        %v448 = vsel %vm436, %v447, 0.0
        %449 = vadd.xlane.f32.xlu0 %v448
        %v450 = vpop.xlane.xlu0 %449
        %v451 = vrot.slane %v450, 4
        %v452 = vadd.f32 %v450, %v451
        %v453 = vrot.slane %v452, 2
        %v454 = vadd.f32 %v452, %v453
        %v455 = vrot.slane %v454, 1
        %v456 = vadd.f32 %v454, %v455
        %s457 = vtos %v456
        %vm458 = vcmp.eq.s32.totalorder %v349, 0
        %vm459 = vcmp.eq.s32.totalorder %v349, 2
        %vm460 = vcmp.eq.s32.totalorder %v349, 3
        %vm461 = vcmp.eq.s32.totalorder %v349, 4
        %v462 = vstv %s457
        %v463 = vsel %vm461, %v462, 0.0
        %v464 = vstv %s446
        %v465 = vsel %vm460, %v464, %v463
        %v466 = vstv %s414
        %v467 = vsel %vm459, %v466, %v465
        %v468 = vstv %s379
        %v469 = vsel %vm458, %v468, %v467
        %470 = vst [vmem:[#allocation5] sm:$0x1] %v469
      $region48: #{multibox_loss.1} parent=43 // pred_fallthru
        _
      %s471 = smul.u32 %s22, 128
      %v472 = vld [vmem:[#allocation3] sm:$0x1]
      %s473 = sshra.s32 %s471, 7
      %s474 = sand.u32 %s471, 127
      %s475 = scalar_lea.vmem [#allocation3], %s473
      %v476 = vld [vmem:[%s475] sm:$0x1]
      %v477 = vperm.slane %v476, 0
      %v478 = vlaneseq
      %v479 = vshrl.u32 %v478, 7
      %481 = vset.pattern.permute.xlu0 %v479
      %482 = vperm.xlu0 %481, %v477
      %v483 = vpop.permute.xlu0 %482
      %v484 = vlaneseq
      %v485 = vshrl.u32 %v484, 7
      %v486 = vadd.s32 %v485, 8
      %487 = vset.pattern.permute.xlu0 %v486
      %488 = vperm.xlu0 %487, %v477
      %v489 = vpop.permute.xlu0 %488
      %v490 = vlaneseq
      %v491 = vshrl.u32 %v490, 7
      %v492 = vadd.s32 %v491, 16
      %493 = vset.pattern.permute.xlu0 %v492
      %494 = vperm.xlu0 %493, %v477
      %v495 = vpop.permute.xlu0 %494
      %v496 = vlaneseq
      %v497 = vshrl.u32 %v496, 7
      %v498 = vadd.s32 %v497, 24
      %499 = vset.pattern.permute.xlu0 %v498
      %500 = vperm.xlu0 %499, %v477
      %v501 = vpop.permute.xlu0 %500
      %v502 = vlaneseq
      %v503 = vshrl.u32 %v502, 7
      %v504 = vadd.s32 %v503, 32
      %505 = vset.pattern.permute.xlu0 %v504
      %506 = vperm.xlu0 %505, %v477
      %v507 = vpop.permute.xlu0 %506
      %v508 = vlaneseq
      %v509 = vshrl.u32 %v508, 7
      %v510 = vadd.s32 %v509, 40
      %511 = vset.pattern.permute.xlu0 %v510
      %512 = vperm.xlu0 %511, %v477
      %v513 = vpop.permute.xlu0 %512
      %v514 = vlaneseq
      %v515 = vshrl.u32 %v514, 7
      %v516 = vadd.s32 %v515, 48
      %517 = vset.pattern.permute.xlu0 %v516
      %518 = vperm.xlu0 %517, %v477
      %v519 = vpop.permute.xlu0 %518
      %v520 = vlaneseq
      %v521 = vshrl.u32 %v520, 7
      %v522 = vadd.s32 %v521, 56
      %523 = vset.pattern.permute.xlu0 %v522
      %524 = vperm.xlu0 %523, %v477
      %v525 = vpop.permute.xlu0 %524
      %v526 = vlaneseq
      %v527 = vshrl.u32 %v526, 7
      %v528 = vadd.s32 %v527, 64
      %529 = vset.pattern.permute.xlu0 %v528
      %530 = vperm.xlu0 %529, %v477
      %v531 = vpop.permute.xlu0 %530
      %v532 = vlaneseq
      %v533 = vshrl.u32 %v532, 7
      %v534 = vadd.s32 %v533, 72
      %535 = vset.pattern.permute.xlu0 %v534
      %536 = vperm.xlu0 %535, %v477
      %v537 = vpop.permute.xlu0 %536
      %v538 = vlaneseq
      %v539 = vshrl.u32 %v538, 7
      %v540 = vadd.s32 %v539, 80
      %541 = vset.pattern.permute.xlu0 %v540
      %542 = vperm.xlu0 %541, %v477
      %v543 = vpop.permute.xlu0 %542
      %v544 = vlaneseq
      %v545 = vshrl.u32 %v544, 7
      %v546 = vadd.s32 %v545, 88
      %547 = vset.pattern.permute.xlu0 %v546
      %548 = vperm.xlu0 %547, %v477
      %v549 = vpop.permute.xlu0 %548
      %v550 = vlaneseq
      %v551 = vshrl.u32 %v550, 7
      %v552 = vadd.s32 %v551, 96
      %553 = vset.pattern.permute.xlu0 %v552
      %554 = vperm.xlu0 %553, %v477
      %v555 = vpop.permute.xlu0 %554
      %v556 = vlaneseq
      %v557 = vshrl.u32 %v556, 7
      %v558 = vadd.s32 %v557, 104
      %559 = vset.pattern.permute.xlu0 %v558
      %560 = vperm.xlu0 %559, %v477
      %v561 = vpop.permute.xlu0 %560
      %v562 = vlaneseq
      %v563 = vshrl.u32 %v562, 7
      %v564 = vadd.s32 %v563, 112
      %565 = vset.pattern.permute.xlu0 %v564
      %566 = vperm.xlu0 %565, %v477
      %v567 = vpop.permute.xlu0 %566
      %v568 = vlaneseq
      %v569 = vshrl.u32 %v568, 7
      %v570 = vadd.s32 %v569, 120
      %571 = vset.pattern.permute.xlu0 %v570
      %572 = vperm.xlu0 %571, %v477
      %v573 = vpop.permute.xlu0 %572
      %v574 = vlaneseq
      %v575 = vshrl.u32 %v574, 7
      %v576 = vadd.s32 %v575, 8
      %v577 = vadd.s32 %v575, 16
      %v578 = vadd.s32 %v575, 24
      %v579 = vadd.s32 %v575, 32
      %v580 = vadd.s32 %v575, 40
      %v581 = vadd.s32 %v575, 48
      %v582 = vadd.s32 %v575, 56
      %v583 = vadd.s32 %v575, 64
      %v584 = vadd.s32 %v575, 72
      %v585 = vadd.s32 %v575, 80
      %v586 = vadd.s32 %v575, 88
      %v587 = vadd.s32 %v575, 96
      %v588 = vadd.s32 %v575, 104
      %v589 = vadd.s32 %v575, 112
      %v590 = vadd.s32 %v575, 120
      %v591 = vstv %s471
      %v592 = vadd.s32 %v591, %v575
      %v593 = vadd.s32 %v591, %v576
      %v594 = vadd.s32 %v591, %v577
      %v595 = vadd.s32 %v591, %v578
      %v596 = vadd.s32 %v591, %v579
      %v597 = vadd.s32 %v591, %v580
      %v598 = vadd.s32 %v591, %v581
      %v599 = vadd.s32 %v591, %v582
      %v600 = vadd.s32 %v591, %v583
      %v601 = vadd.s32 %v591, %v584
      %v602 = vadd.s32 %v591, %v585
      %v603 = vadd.s32 %v591, %v586
      %v604 = vadd.s32 %v591, %v587
      %v605 = vadd.s32 %v591, %v588
      %v606 = vadd.s32 %v591, %v589
      %v607 = vadd.s32 %v591, %v590
      %v609 = vperm.slane %v472, 0
      %vm611 = vcmp.gt.f32.partialorder %v483, %v609
      %vm612 = vcmp.gt.f32.partialorder %v489, %v609
      %vm613 = vcmp.gt.f32.partialorder %v495, %v609
      %vm614 = vcmp.gt.f32.partialorder %v501, %v609
      %vm615 = vcmp.gt.f32.partialorder %v507, %v609
      %vm616 = vcmp.gt.f32.partialorder %v513, %v609
      %vm617 = vcmp.gt.f32.partialorder %v519, %v609
      %vm618 = vcmp.gt.f32.partialorder %v525, %v609
      %vm619 = vcmp.gt.f32.partialorder %v531, %v609
      %vm620 = vcmp.gt.f32.partialorder %v537, %v609
      %vm621 = vcmp.gt.f32.partialorder %v543, %v609
      %vm622 = vcmp.gt.f32.partialorder %v549, %v609
      %vm623 = vcmp.gt.f32.partialorder %v555, %v609
      %vm624 = vcmp.gt.f32.partialorder %v561, %v609
      %vm625 = vcmp.gt.f32.partialorder %v567, %v609
      %vm626 = vcmp.gt.f32.partialorder %v573, %v609
      %vm627 = vcmp.eq.f32.partialorder %v483, %v609
      %vm628 = vcmp.eq.f32.partialorder %v489, %v609
      %vm629 = vcmp.eq.f32.partialorder %v495, %v609
      %vm630 = vcmp.eq.f32.partialorder %v501, %v609
      %vm631 = vcmp.eq.f32.partialorder %v507, %v609
      %vm632 = vcmp.eq.f32.partialorder %v513, %v609
      %vm633 = vcmp.eq.f32.partialorder %v519, %v609
      %vm634 = vcmp.eq.f32.partialorder %v525, %v609
      %vm635 = vcmp.eq.f32.partialorder %v531, %v609
      %vm636 = vcmp.eq.f32.partialorder %v537, %v609
      %vm637 = vcmp.eq.f32.partialorder %v543, %v609
      %vm638 = vcmp.eq.f32.partialorder %v549, %v609
      %vm639 = vcmp.eq.f32.partialorder %v555, %v609
      %vm640 = vcmp.eq.f32.partialorder %v561, %v609
      %vm641 = vcmp.eq.f32.partialorder %v567, %v609
      %vm642 = vcmp.eq.f32.partialorder %v573, %v609
      %vm643 = vcmp.lt.s32.totalorder %v592, %v349
      %vm644 = vcmp.lt.s32.totalorder %v593, %v349
      %vm645 = vcmp.lt.s32.totalorder %v594, %v349
      %vm646 = vcmp.lt.s32.totalorder %v595, %v349
      %vm647 = vcmp.lt.s32.totalorder %v596, %v349
      %vm648 = vcmp.lt.s32.totalorder %v597, %v349
      %vm649 = vcmp.lt.s32.totalorder %v598, %v349
      %vm650 = vcmp.lt.s32.totalorder %v599, %v349
      %vm651 = vcmp.lt.s32.totalorder %v600, %v349
      %vm652 = vcmp.lt.s32.totalorder %v601, %v349
      %vm653 = vcmp.lt.s32.totalorder %v602, %v349
      %vm654 = vcmp.lt.s32.totalorder %v603, %v349
      %vm655 = vcmp.lt.s32.totalorder %v604, %v349
      %vm656 = vcmp.lt.s32.totalorder %v605, %v349
      %vm657 = vcmp.lt.s32.totalorder %v606, %v349
      %vm658 = vcmp.lt.s32.totalorder %v607, %v349
      %vm659 = vmand %vm627, %vm643
      %vm660 = vmand %vm628, %vm644
      %vm661 = vmand %vm629, %vm645
      %vm662 = vmand %vm630, %vm646
      %vm663 = vmand %vm631, %vm647
      %vm664 = vmand %vm632, %vm648
      %vm665 = vmand %vm633, %vm649
      %vm666 = vmand %vm634, %vm650
      %vm667 = vmand %vm635, %vm651
      %vm668 = vmand %vm636, %vm652
      %vm669 = vmand %vm637, %vm653
      %vm670 = vmand %vm638, %vm654
      %vm671 = vmand %vm639, %vm655
      %vm672 = vmand %vm640, %vm656
      %vm673 = vmand %vm641, %vm657
      %vm674 = vmand %vm642, %vm658
      %vm675 = vmor %vm611, %vm659
      %vm676 = vmor %vm612, %vm660
      %vm677 = vmor %vm613, %vm661
      %vm678 = vmor %vm614, %vm662
      %vm679 = vmor %vm615, %vm663
      %vm680 = vmor %vm616, %vm664
      %vm681 = vmor %vm617, %vm665
      %vm682 = vmor %vm618, %vm666
      %vm683 = vmor %vm619, %vm667
      %vm684 = vmor %vm620, %vm668
      %vm685 = vmor %vm621, %vm669
      %vm686 = vmor %vm622, %vm670
      %vm687 = vmor %vm623, %vm671
      %vm688 = vmor %vm624, %vm672
      %vm689 = vmor %vm625, %vm673
      %vm690 = vmor %vm626, %vm674
      %v691 = vld [vmem:[#allocation4] sm:$0x1]
      %v692 = vsel %vm675, 1, 0
      %v693 = vsel %vm676, 1, 0
      %v694 = vsel %vm677, 1, 0
      %v695 = vsel %vm678, 1, 0
      %v696 = vsel %vm679, 1, 0
      %v697 = vsel %vm680, 1, 0
      %v698 = vsel %vm681, 1, 0
      %v699 = vsel %vm682, 1, 0
      %v700 = vsel %vm683, 1, 0
      %v701 = vsel %vm684, 1, 0
      %v702 = vsel %vm685, 1, 0
      %v703 = vsel %vm686, 1, 0
      %v704 = vsel %vm687, 1, 0
      %v705 = vsel %vm688, 1, 0
      %v706 = vsel %vm689, 1, 0
      %v707 = vsel %vm690, 1, 0
      %v708 = vcvt.s32.f32 %v692
      %v709 = vcvt.s32.f32 %v693
      %v710 = vcvt.s32.f32 %v694
      %v711 = vcvt.s32.f32 %v695
      %v712 = vcvt.s32.f32 %v696
      %v713 = vcvt.s32.f32 %v697
      %v714 = vcvt.s32.f32 %v698
      %v715 = vcvt.s32.f32 %v699
      %v716 = vcvt.s32.f32 %v700
      %v717 = vcvt.s32.f32 %v701
      %v718 = vcvt.s32.f32 %v702
      %v719 = vcvt.s32.f32 %v703
      %v720 = vcvt.s32.f32 %v704
      %v721 = vcvt.s32.f32 %v705
      %v722 = vcvt.s32.f32 %v706
      %v723 = vcvt.s32.f32 %v707
      %v724 = vpack.c.bf16 %v709, %v708
      %v725 = vpack.c.bf16 %v711, %v710
      %v726 = vpack.c.bf16 %v713, %v712
      %v727 = vpack.c.bf16 %v715, %v714
      %v728 = vpack.c.bf16 %v717, %v716
      %v729 = vpack.c.bf16 %v719, %v718
      %v730 = vpack.c.bf16 %v721, %v720
      %v731 = vpack.c.bf16 %v723, %v722
      %732 = vmatpush.bf16.msra.mxu0 %v731
      %733 = vmatpush.bf16.msra.mxu0 %v730
      %734 = vmatpush.bf16.msra.mxu0 %v729
      %735 = vmatpush.bf16.msra.mxu0 %v728
      %736 = vmatpush.bf16.msra.mxu0 %v727
      %737 = vmatpush.bf16.msra.mxu0 %v726
      %738 = vmatpush.bf16.msra.mxu0 %v725
      %739 = vmatpush.bf16.msra.mxu0 %v724
      %740 = vmatmul.bf16.gmra.mxu0 1065369472
      %v741 = vpop.f32.mrf.mxu0
      %v742 = vadd.f32 0.0, %v741
      %v743 = vpop.f32.mrf.mxu0
      %744 = vdwg.mxu0
      %v745 = vadd.f32 %v691, %v742
      %746 = vst [vmem:[#allocation4] sm:$0x1] %v745
      // Predicated region
      $region49: #{multibox_loss.1} parent=43 // pred_check
        %p747 = pneg %p351
      $region50: #{multibox_loss.1} parent=43 // pred_check_branch
        %749 = sbr.rel (%p747) target = $region52
      $region51: #{multibox_loss.1} parent=43 // pred_region
        %v750 = vsel %vm347, 1, 0
        %v751 = vcvt.s32.f32 %v750
        %vm752 = vcmask 1040384
        %v753 = vsel %vm752, %v751, 0.0
        %754 = vadd.xlane.f32.xlu0 %v753
        %v755 = vpop.xlane.xlu0 %754
        %v756 = vrot.slane %v755, 4
        %v757 = vadd.f32 %v755, %v756
        %v758 = vrot.slane %v757, 2
        %v759 = vadd.f32 %v757, %v758
        %v760 = vrot.slane %v759, 1
        %v761 = vadd.f32 %v759, %v760
        %s762 = vtos %v761
        %s763 = smul.f32 %s762, 7.0
        %s764 = smin.f32 %s763, 127.0
        %v765 = vld [vmem:[#allocation4] sm:$0x1]
        %v766 = vstv %s764
        %vm767 = vcmp.lt.f32.partialorder %v765, %v766
        %vm768 = vmor %vm347, %vm767
        %v769 = vld [vmem:[#allocation2] sm:$0x1]
        %v770 = vsel %vm768, %v769, 0.0
        %v771 = vsel %vm752, %v770, 0.0
        %772 = vadd.xlane.f32.xlu0 %v771
        %v773 = vpop.xlane.xlu0 %772
        %v774 = vrot.slane %v773, 4
        %v775 = vadd.f32 %v773, %v774
        %v776 = vrot.slane %v775, 2
        %v777 = vadd.f32 %v775, %v776
        %v778 = vrot.slane %v777, 1
        %v779 = vadd.f32 %v777, %v778
        %s780 = vtos %v779
        %vm781 = vcmp.eq.s32.totalorder %v349, 1
        %v782 = vld [vmem:[#allocation5] sm:$0x1]
        %v783 = vstv %s780
        %v784 = vsel %vm781, %v783, %v782
        %785 = vst [vmem:[%s344] sm:$0x1] %v784
      $region52: #{multibox_loss.1} parent=43 // pred_fallthru
        _
      %p786 = scmp.lt.s32.totalorder %s21, 1
      %s787 = scalar_select %p786, %s21, 1
      %s788 = scalar_lea.vmem %s6, %s787
      // Predicated region
      $region53: #{multibox_loss.1} parent=43 // pred_check
        %p789 = pneg %p203
      $region54: #{multibox_loss.1} parent=43 // pred_check_branch
        %791 = sbr.rel (%p789) target = $region56
      $region55: #{multibox_loss.1} parent=43 // pred_region
        _
      $region56: #{multibox_loss.1} parent=43 // pred_fallthru
        _
    $region44: #{multibox_loss.1} parent=5 // pred_fallthru
      _
    %p792 = scmp.le.s32.totalorder 2, %s12
    // Predicated region
    $region57: #{multibox_loss.1} parent=5 // pred_check
      %p793 = pneg %p792
    $region58: #{multibox_loss.1} parent=5 // pred_check_branch
      %795 = sbr.rel (%p793) target = $region60
    $region59: #{multibox_loss.1} parent=5 // pred_region
      %s796 = ssub.s32 %s12, 2
      // Predicated region
      $region61: #{multibox_loss.1} parent=59 // pred_check
        %p797 = pneg %p209
      $region62: #{multibox_loss.1} parent=59 // pred_check_branch
        %799 = sbr.rel (%p797) target = $region64
      $region63: #{multibox_loss.1} parent=59 // pred_region
        %p800 = scmp.lt.s32.totalorder %s23, 1
        %s801 = scalar_select %p800, %s23, 1
        %s802 = scalar_lea.vmem %s6, %s801
      $region64: #{multibox_loss.1} parent=59 // pred_fallthru
        _
    $region60: #{multibox_loss.1} parent=5 // pred_fallthru
      _
  $region6: #{multibox_loss.1} parent=0 // loop_footer
    %s16 = sadd.s32 1, %s12
  $region7: #{multibox_loss.1} parent=0 // loop_footer_branch
    %11 = sbr.rel target = $region3
  $region8: #{multibox_loss.1} parent=0 // loop_exit
    _

</llo_original>
